<compile_context>
chip_gen: v6e
topology: v6e:2x2x1
jax: 0.10.0
libtpu: 0.0.40
codegen_flags: <defaults>
</compile_context>

<pallas_src>
import functools

import jax
import jax.numpy as jnp
from jax.experimental import pallas as pl
from jax.experimental.pallas import tpu as pltpu


def _round_up(x, m):
    return ((x + m - 1) // m) * m


def _label_smooth_ce_kernel(
    x_ref, t_ref, o_ref, m_sc, l_sc, sx_sc, xt_sc,
    *, epsilon, num_classes, class_block, has_class_tail
):
    # x_ref: (TM, TC) logits tile; t_ref: (TM, 1) int32 class ids
    # o_ref: (TM, 1) per-row loss (written on the last class block)
    # scratch (all (TM, 1) f32): running max, running exp-sum, sum(x), x[target]
    j = pl.program_id(1)
    num_j = pl.num_programs(1)

    @pl.when(j == 0)
    def _():
        # -1e30 sentinel (not a true -inf): fine for realistic logit magnitudes.
        m_sc[...] = jnp.full_like(m_sc, -1e30)
        l_sc[...] = jnp.zeros_like(l_sc)
        sx_sc[...] = jnp.zeros_like(sx_sc)
        xt_sc[...] = jnp.zeros_like(xt_sc)

    def update(mask_tail):
        x = x_ref[...].astype(jnp.float32)                 # (TM, TC), f32 math
        tm, tc = x.shape
        local_col = jax.lax.broadcasted_iota(jnp.int32, (tm, tc), 1)
        t_shift = t_ref[...] - j * class_block             # (TM, 1) int32

        if mask_tail:
            # Only the ragged final class block pays for masking.
            valid = local_col < (num_classes - j * class_block)
            x_lse = jnp.where(valid, x, -1e30)             # for max / exp
            x_sum = jnp.where(valid, x, 0.0)               # for plain sums
        else:
            x_lse = x
            x_sum = x

        blk_max = jnp.max(x_lse, axis=-1, keepdims=True)                    # (TM,1)
        blk_sum_x = jnp.sum(x_sum, axis=-1, keepdims=True)                  # (TM,1)
        blk_xt = jnp.sum(jnp.where(local_col == t_shift, x_sum, 0.0),
                         axis=-1, keepdims=True)                            # (TM,1)

        # Online logsumexp update across class blocks.
        m_prev = m_sc[...]
        m_new = jnp.maximum(m_prev, blk_max)
        l_sc[...] = l_sc[...] * jnp.exp(m_prev - m_new) + jnp.sum(
            jnp.exp(x_lse - m_new), axis=-1, keepdims=True
        )
        m_sc[...] = m_new
        sx_sc[...] = sx_sc[...] + blk_sum_x
        xt_sc[...] = xt_sc[...] + blk_xt

    if has_class_tail:
        @pl.when(j < num_j - 1)
        def _():
            update(False)          # fast path: no masking on interior blocks

        @pl.when(j == num_j - 1)
        def _():
            update(True)           # masked path: ragged final class block
    else:
        update(False)              # C % TC == 0: never mask

    @pl.when(j == num_j - 1)
    def _():
        lse = m_sc[...] + jnp.log(l_sc[...])
        # sum(smooth) == 1  =>  per_row = lse - (1-eps)*x_t - (eps/C)*sum(x)
        o_ref[...] = (
            lse
            - (1.0 - epsilon) * xt_sc[...]
            - (epsilon / num_classes) * sx_sc[...]
        )


def cross_entropy_label_smooth(
    logits, targets, epsilon, *, row_block=256, class_block=None
):
    """logits: (N, C) float (f32/bf16/f16); targets: (N,) int. Returns scalar f32 loss."""
    n, c = logits.shape
    itemsize = jnp.dtype(logits.dtype).itemsize
    # Sublane packing: 8 rows for 32-bit, 16 for 16-bit, 32 for 8-bit dtypes.
    sub = {4: 8, 2: 16, 1: 32}.get(itemsize, 8)

    # Class tile default: lane-dense, sized to amortize ~0.35us/step overhead
    # while keeping double-buffered tiles small (~8-16 MiB) even on v7x VMEM.
    if class_block is None:
        class_block = 8192 if itemsize <= 2 else 4096
    class_block = _round_up(class_block, 128)

    # Row tile: multiple of `sub`; aim for >= 2 row blocks so the "parallel"
    # row axis can shard across both TensorCores on megacore parts.
    row_block = _round_up(row_block, sub)
    tm = max(sub, min(row_block, _round_up(pl.cdiv(n, 2), sub)))

    # Class tile: full extent for small C (no masking); otherwise a lane-dense
    # multiple of 128, masking only the ragged final block if C % TC != 0.
    if c <= class_block:
        tc, has_tail = c, False
    else:
        tc = class_block
        has_tail = (c % tc) != 0

    grid = (pl.cdiv(n, tm), pl.cdiv(c, tc))
    t2 = targets.astype(jnp.int32).reshape(n, 1)

    per_row = pl.pallas_call(
        functools.partial(
            _label_smooth_ce_kernel,
            epsilon=float(epsilon),
            num_classes=c,
            class_block=tc,
            has_class_tail=has_tail,
        ),
        out_shape=jax.ShapeDtypeStruct((n, 1), jnp.float32),
        grid_spec=pltpu.PrefetchScalarGridSpec(
            num_scalar_prefetch=0,
            grid=grid,
            in_specs=[
                pl.BlockSpec((tm, tc), lambda i, j: (i, j)),   # logits tile
                pl.BlockSpec((tm, 1), lambda i, j: (i, 0)),    # targets tile
            ],
            out_specs=pl.BlockSpec((tm, 1), lambda i, j: (i, 0)),
            scratch_shapes=[pltpu.VMEM((tm, 1), jnp.float32)] * 4,
        ),
        compiler_params=pltpu.CompilerParams(
            dimension_semantics=("parallel", "arbitrary"),
            vmem_limit_bytes=48 * 1024 * 1024,
        ),
    )(logits, t2)

    # mean over batch, sum over classes == sum of per-row losses / true N.
    return jnp.sum(per_row[:, 0]) / n


def _reference(logits, targets, epsilon):
    n, c = logits.shape
    log_probs = jax.nn.log_softmax(logits.astype(jnp.float32), axis=1)
    onehot = jax.nn.one_hot(targets, c, dtype=jnp.float32)
    smooth = (1.0 - epsilon) * onehot + epsilon / c
    return (-smooth * log_probs).mean(0).sum()


if __name__ == "__main__":
    key = jax.random.PRNGKey(0)
    epsilon = 0.1
    k1, k2, k3, k4, k5, k6 = jax.random.split(key, 6)

    # Case 1: small, single-block path (batch=8, num_classes=16).
    N, C = 8, 16
    logits = jax.random.normal(k1, (N, C), dtype=jnp.float32)
    targets = jax.random.randint(k2, (N,), 0, C, dtype=jnp.int32)
    loss = jax.block_until_ready(cross_entropy_label_smooth(logits, targets, epsilon))
    ref = _reference(logits, targets, epsilon)
    assert jnp.allclose(loss, ref, rtol=1e-5, atol=1e-5), (loss, ref)

    # Case 2: ragged row blocks (no padding) + multi class blocks, unmasked
    # fast path (C divisible by the class tile), online logsumexp.
    N2, C2 = 40, 384
    logits2 = jax.random.normal(k3, (N2, C2), dtype=jnp.float32)
    targets2 = jax.random.randint(k4, (N2,), 0, C2, dtype=jnp.int32)
    loss2 = jax.block_until_ready(
        cross_entropy_label_smooth(
            logits2, targets2, epsilon, row_block=16, class_block=128
        )
    )
    ref2 = _reference(logits2, targets2, epsilon)
    assert jnp.allclose(loss2, ref2, rtol=1e-5, atol=1e-5), (loss2, ref2)

    # Case 3: bf16 logits (16-sublane row tile) + ragged final class block
    # (C=200 -> blocks of 128 + masked tail of 72) + ragged row block.
    N3, C3 = 24, 200
    logits3 = jax.random.normal(k5, (N3, C3), dtype=jnp.float32).astype(jnp.bfloat16)
    targets3 = jax.random.randint(k6, (N3,), 0, C3, dtype=jnp.int32)
    loss3 = jax.block_until_ready(
        cross_entropy_label_smooth(
            logits3, targets3, epsilon, row_block=16, class_block=128
        )
    )
    ref3 = _reference(logits3, targets3, epsilon)
    assert jnp.allclose(loss3, ref3, rtol=1e-4, atol=1e-4), (loss3, ref3)

    print("KERNEL_OK")
</pallas_src>

<mosaic_0001>
module attributes {stable_mosaic.version = 11 : i64} {
  func.func @_label_smooth_ce_kernel(%arg0: i32, %arg1: i32, %arg2: memref<8x16xf32, #tpu.memory_space<vmem>>, %arg3: memref<8x1xi32, #tpu.memory_space<vmem>>, %arg4: memref<8x1xf32, #tpu.memory_space<vmem>>, %arg5: memref<8x1xf32, #tpu.memory_space<vmem>>, %arg6: memref<8x1xf32, #tpu.memory_space<vmem>>, %arg7: memref<8x1xf32, #tpu.memory_space<vmem>>, %arg8: memref<8x1xf32, #tpu.memory_space<vmem>>) attributes {dimension_semantics = [#tpu.dimension_semantics<parallel>, #tpu.dimension_semantics<arbitrary>], iteration_bounds = array<i64: 1, 1>, scalar_prefetch = 0 : i64, scratch_operands = 4 : i64, tpu.core_type = #tpu.core_type<tc>, window_params = [{transform_indices = @transform_0, window_bounds = array<i64: 8, 16>}, {transform_indices = @transform_1, window_bounds = array<i64: 8, 1>}, {transform_indices = @transform_2, window_bounds = array<i64: 8, 1>}]} {
    %c0_i32 = arith.constant 0 : i32
    %0 = arith.cmpi eq, %arg1, %c0_i32 : i32
    %1 = arith.extui %0 : i1 to i32
    %c0_i32_0 = arith.constant 0 : i32
    %2 = arith.cmpi ne, %1, %c0_i32_0 : i32
    scf.if %2 {
      %cst_26 = arith.constant -1.000000e+30 : f32
      %42 = vector.broadcast %cst_26 : f32 to vector<8x1xf32>
      %c0_27 = arith.constant 0 : index
      %c0_28 = arith.constant 0 : index
      %43 = vector.load %arg5[%c0_27, %c0_28] : memref<8x1xf32, #tpu.memory_space<vmem>>, vector<8x1xf32>
      tpu.vector_store %arg5[%c0_27, %c0_28], %42 {strides = array<i32>} : memref<8x1xf32, #tpu.memory_space<vmem>>, vector<8x1xf32>,
      %cst_29 = arith.constant 0.000000e+00 : f32
      %44 = vector.broadcast %cst_29 : f32 to vector<8x1xf32>
      %c0_30 = arith.constant 0 : index
      %c0_31 = arith.constant 0 : index
      %45 = vector.load %arg6[%c0_30, %c0_31] : memref<8x1xf32, #tpu.memory_space<vmem>>, vector<8x1xf32>
      tpu.vector_store %arg6[%c0_30, %c0_31], %44 {strides = array<i32>} : memref<8x1xf32, #tpu.memory_space<vmem>>, vector<8x1xf32>,
      %cst_32 = arith.constant 0.000000e+00 : f32
      %46 = vector.broadcast %cst_32 : f32 to vector<8x1xf32>
      %c0_33 = arith.constant 0 : index
      %c0_34 = arith.constant 0 : index
      %47 = vector.load %arg7[%c0_33, %c0_34] : memref<8x1xf32, #tpu.memory_space<vmem>>, vector<8x1xf32>
      tpu.vector_store %arg7[%c0_33, %c0_34], %46 {strides = array<i32>} : memref<8x1xf32, #tpu.memory_space<vmem>>, vector<8x1xf32>,
      %cst_35 = arith.constant 0.000000e+00 : f32
      %48 = vector.broadcast %cst_35 : f32 to vector<8x1xf32>
      %c0_36 = arith.constant 0 : index
      %c0_37 = arith.constant 0 : index
      %49 = vector.load %arg8[%c0_36, %c0_37] : memref<8x1xf32, #tpu.memory_space<vmem>>, vector<8x1xf32>
      tpu.vector_store %arg8[%c0_36, %c0_37], %48 {strides = array<i32>} : memref<8x1xf32, #tpu.memory_space<vmem>>, vector<8x1xf32>,
    } else {
    }
    %c0 = arith.constant 0 : index
    %c0_1 = arith.constant 0 : index
    %3 = vector.load %arg2[%c0, %c0_1] : memref<8x16xf32, #tpu.memory_space<vmem>>, vector<8x16xf32>
    %4 = tpu.iota {dimensions = array<i32: 1>} : vector<8x16xi32>
    %c0_2 = arith.constant 0 : index
    %c0_3 = arith.constant 0 : index
    %5 = vector.load %arg3[%c0_2, %c0_3] : memref<8x1xi32, #tpu.memory_space<vmem>>, vector<8x1xi32>
    %c16_i32 = arith.constant 16 : i32
    %6 = arith.muli %arg1, %c16_i32 : i32
    %7 = vector.broadcast %6 : i32 to vector<8x1xi32>
    %8 = arith.subi %5, %7 : vector<8x1xi32>
    %cst = arith.constant dense<0xFF800000> : vector<8xf32>
    %9 = vector.multi_reduction <maximumf>, %3, %cst [1] : vector<8x16xf32> to vector<8xf32>
    %10 = vector.shape_cast %9 : vector<8xf32> to vector<8x1xf32>
    %cst_4 = arith.constant dense<0.000000e+00> : vector<8xf32>
    %11 = vector.multi_reduction <add>, %3, %cst_4 [1] : vector<8x16xf32> to vector<8xf32>
    %12 = vector.shape_cast %11 : vector<8xf32> to vector<8x1xf32>
    %13 = vector.broadcast %8 : vector<8x1xi32> to vector<8x16xi32>
    %14 = arith.cmpi eq, %4, %13 : vector<8x16xi32>
    %cst_5 = arith.constant 0.000000e+00 : f32
    %15 = vector.broadcast %cst_5 : f32 to vector<8x16xf32>
    %16 = arith.select %14, %3, %15 : vector<8x16xi1>, vector<8x16xf32>
    %cst_6 = arith.constant dense<0.000000e+00> : vector<8xf32>
    %17 = vector.multi_reduction <add>, %16, %cst_6 [1] : vector<8x16xf32> to vector<8xf32>
    %18 = vector.shape_cast %17 : vector<8xf32> to vector<8x1xf32>
    %c0_7 = arith.constant 0 : index
    %c0_8 = arith.constant 0 : index
    %19 = vector.load %arg5[%c0_7, %c0_8] : memref<8x1xf32, #tpu.memory_space<vmem>>, vector<8x1xf32>
    %20 = arith.maximumf %19, %10 : vector<8x1xf32>
    %c0_9 = arith.constant 0 : index
    %c0_10 = arith.constant 0 : index
    %21 = vector.load %arg6[%c0_9, %c0_10] : memref<8x1xf32, #tpu.memory_space<vmem>>, vector<8x1xf32>
    %22 = arith.subf %19, %20 : vector<8x1xf32>
    %23 = math.exp %22 : vector<8x1xf32>
    %24 = arith.mulf %21, %23 : vector<8x1xf32>
    %25 = vector.broadcast %20 : vector<8x1xf32> to vector<8x16xf32>
    %26 = arith.subf %3, %25 : vector<8x16xf32>
    %27 = math.exp %26 : vector<8x16xf32>
    %cst_11 = arith.constant dense<0.000000e+00> : vector<8xf32>
    %28 = vector.multi_reduction <add>, %27, %cst_11 [1] : vector<8x16xf32> to vector<8xf32>
    %29 = vector.shape_cast %28 : vector<8xf32> to vector<8x1xf32>
    %30 = arith.addf %24, %29 : vector<8x1xf32>
    %c0_12 = arith.constant 0 : index
    %c0_13 = arith.constant 0 : index
    %31 = vector.load %arg6[%c0_12, %c0_13] : memref<8x1xf32, #tpu.memory_space<vmem>>, vector<8x1xf32>
    tpu.vector_store %arg6[%c0_12, %c0_13], %30 {strides = array<i32>} : memref<8x1xf32, #tpu.memory_space<vmem>>, vector<8x1xf32>,
    %c0_14 = arith.constant 0 : index
    %c0_15 = arith.constant 0 : index
    %32 = vector.load %arg5[%c0_14, %c0_15] : memref<8x1xf32, #tpu.memory_space<vmem>>, vector<8x1xf32>
    tpu.vector_store %arg5[%c0_14, %c0_15], %20 {strides = array<i32>} : memref<8x1xf32, #tpu.memory_space<vmem>>, vector<8x1xf32>,
    %c0_16 = arith.constant 0 : index
    %c0_17 = arith.constant 0 : index
    %33 = vector.load %arg7[%c0_16, %c0_17] : memref<8x1xf32, #tpu.memory_space<vmem>>, vector<8x1xf32>
    %34 = arith.addf %33, %12 : vector<8x1xf32>
    %c0_18 = arith.constant 0 : index
    %c0_19 = arith.constant 0 : index
    %35 = vector.load %arg7[%c0_18, %c0_19] : memref<8x1xf32, #tpu.memory_space<vmem>>, vector<8x1xf32>
    tpu.vector_store %arg7[%c0_18, %c0_19], %34 {strides = array<i32>} : memref<8x1xf32, #tpu.memory_space<vmem>>, vector<8x1xf32>,
    %c0_20 = arith.constant 0 : index
    %c0_21 = arith.constant 0 : index
    %36 = vector.load %arg8[%c0_20, %c0_21] : memref<8x1xf32, #tpu.memory_space<vmem>>, vector<8x1xf32>
    %37 = arith.addf %36, %18 : vector<8x1xf32>
    %c0_22 = arith.constant 0 : index
    %c0_23 = arith.constant 0 : index
    %38 = vector.load %arg8[%c0_22, %c0_23] : memref<8x1xf32, #tpu.memory_space<vmem>>, vector<8x1xf32>
    tpu.vector_store %arg8[%c0_22, %c0_23], %37 {strides = array<i32>} : memref<8x1xf32, #tpu.memory_space<vmem>>, vector<8x1xf32>,
    %c0_i32_24 = arith.constant 0 : i32
    %39 = arith.cmpi eq, %arg1, %c0_i32_24 : i32
    %40 = arith.extui %39 : i1 to i32
    %c0_i32_25 = arith.constant 0 : i32
    %41 = arith.cmpi ne, %40, %c0_i32_25 : i32
    scf.if %41 {
      %c0_26 = arith.constant 0 : index
      %c0_27 = arith.constant 0 : index
      %42 = vector.load %arg5[%c0_26, %c0_27] : memref<8x1xf32, #tpu.memory_space<vmem>>, vector<8x1xf32>
      %c0_28 = arith.constant 0 : index
      %c0_29 = arith.constant 0 : index
      %43 = vector.load %arg6[%c0_28, %c0_29] : memref<8x1xf32, #tpu.memory_space<vmem>>, vector<8x1xf32>
      %44 = math.log %43 : vector<8x1xf32>
      %45 = arith.addf %42, %44 : vector<8x1xf32>
      %c0_30 = arith.constant 0 : index
      %c0_31 = arith.constant 0 : index
      %46 = vector.load %arg8[%c0_30, %c0_31] : memref<8x1xf32, #tpu.memory_space<vmem>>, vector<8x1xf32>
      %cst_32 = arith.constant 0.899999976 : f32
      %47 = vector.broadcast %cst_32 : f32 to vector<8x1xf32>
      %48 = arith.mulf %47, %46 : vector<8x1xf32>
      %49 = arith.subf %45, %48 : vector<8x1xf32>
      %c0_33 = arith.constant 0 : index
      %c0_34 = arith.constant 0 : index
      %50 = vector.load %arg7[%c0_33, %c0_34] : memref<8x1xf32, #tpu.memory_space<vmem>>, vector<8x1xf32>
      %cst_35 = arith.constant 6.250000e-03 : f32
      %51 = vector.broadcast %cst_35 : f32 to vector<8x1xf32>
      %52 = arith.mulf %51, %50 : vector<8x1xf32>
      %53 = arith.subf %49, %52 : vector<8x1xf32>
      %c0_36 = arith.constant 0 : index
      %c0_37 = arith.constant 0 : index
      %54 = vector.load %arg4[%c0_36, %c0_37] : memref<8x1xf32, #tpu.memory_space<vmem>>, vector<8x1xf32>
      tpu.vector_store %arg4[%c0_36, %c0_37], %53 {strides = array<i32>} : memref<8x1xf32, #tpu.memory_space<vmem>>, vector<8x1xf32>,
    } else {
    }
    return
  }
  func.func @transform_0(%arg0: i32, %arg1: i32) -> (i32, i32) {
    %c0_i32 = arith.constant 0 : i32
    return %arg0, %arg1 : i32, i32
  }
  func.func @transform_1(%arg0: i32, %arg1: i32) -> (i32, i32) {
    %c0_i32 = arith.constant 0 : i32
    %c0_i32_0 = arith.constant 0 : i32
    return %arg0, %c0_i32 : i32, i32
  }
  func.func @transform_2(%arg0: i32, %arg1: i32) -> (i32, i32) {
    %c0_i32 = arith.constant 0 : i32
    %c0_i32_0 = arith.constant 0 : i32
    return %arg0, %c0_i32 : i32, i32
  }
}

</mosaic_0001>

<llo_original>
// kernel: tpu_custom_call.1
$region0: #{tpu_custom_call.1}
  #allocation0 [shape = 'u32[]', space=smem, size = 0x4, offset = 0x4, fixed_abs, tag = 'smem constant byte address 0x4 - core index']
  #allocation1 [shape = 'u32[144,128]{1,0:T(1,128)}', space=vmem, size = 0x12000, scoped, tag = 'internal scratch']
  #allocation2 [shape = 'f32[8,1]{1,0:T(8,128)}', space=vmem, size = 0x1000, scoped, tag = 'scratch operand']
  #allocation3 [shape = 'f32[8,1]{1,0:T(8,128)}', space=vmem, size = 0x1000, scoped, tag = 'scratch operand']
  #allocation4 [shape = 'f32[8,1]{1,0:T(8,128)}', space=vmem, size = 0x1000, scoped, tag = 'scratch operand']
  #allocation5 [shape = 'f32[8,1]{1,0:T(8,128)}', space=vmem, size = 0x1000, scoped, tag = 'scratch operand']
  %s0 = inlined_call_operand.vmem [shape: f32[8,16], index: 0, kind: input, shape index: {}]
  %s1 = inlined_call_operand.vmem [shape: s32[8,1], index: 1, kind: input, shape index: {}]
  %s2 = inlined_call_operand.vmem [shape: f32[8,1], index: 2, kind: output, shape index: {}]
  %s3 = sld [smem:[#allocation0]]
  $region26: #{tpu_custom_call.1} parent=0
    _
  %s5 = ssub.s32 1, %s3
  %s6 = scalar_select 0, %s5, %s3
  // Predicated region
  $region2: #{tpu_custom_call.1} parent=0 // pred_check
    _
  $region3: #{tpu_custom_call.1} parent=0 // pred_check_branch
    %8 = sbr.rel (0) target = $region5
  $region4: #{tpu_custom_call.1} parent=0 // pred_region
    _
  $region5: #{tpu_custom_call.1} parent=0 // pred_fallthru
    _
  // Predicated region
  $region6: #{tpu_custom_call.1} parent=0 // pred_check
    _
  $region7: #{tpu_custom_call.1} parent=0 // pred_check_branch
    %10 = sbr.rel (0) target = $region9
  $region8: #{tpu_custom_call.1} parent=0 // pred_region
    _
  $region9: #{tpu_custom_call.1} parent=0 // pred_fallthru
    _
  %p11 = scmp.eq.s32.totalorder 0, 0
  // Predicated region
  $region10: #{tpu_custom_call.1} parent=0 // pred_check
    %p12 = pneg %p11
  $region11: #{tpu_custom_call.1} parent=0 // pred_check_branch
    %14 = sbr.rel (%p12) target = $region13
  $region12: #{tpu_custom_call.1} parent=0 // pred_region
    %vm15 = vcmask 7168
    %16 = vst.msk [vmem:[#allocation2] sm:$0xff] %vm15, -1e+30
    %17 = vst.msk [vmem:[#allocation3] sm:$0xff] %vm15, 0.0
    %18 = vst.msk [vmem:[#allocation4] sm:$0xff] %vm15, 0.0
    %19 = vst.msk [vmem:[#allocation5] sm:$0xff] %vm15, 0.0
  $region13: #{tpu_custom_call.1} parent=0 // pred_fallthru
    _
  %v20 = vld [vmem:[%s0] sm:$0xff]
  %v21 = vlaneseq
  %v22 = vand.u32 %v21, 127
  %v23 = vld [vmem:[%s1] sm:$0xff]
  %s24 = smul.u32 0, 16
  %v25 = vstv %s24
  %v26 = vsub.s32 %v23, %v25
  %vm27 = vcmask 130048
  %v28 = vsel %vm27, %v20, -inf
  %29 = vmax.xlane.f32.xlu0 %v28
  %v30 = vpop.xlane.xlu0 %29
  %v31 = vsel %vm27, %v20, 0.0
  %32 = vadd.xlane.f32.xlu0 %v31
  %v33 = vpop.xlane.xlu0 %32
  %34 = vset.pattern.permute.xlu0 0
  %35 = vperm.xlu0 %34, %v26
  %v36 = vpop.permute.xlu0 %35
  %vm37 = vcmp.eq.s32.totalorder %v22, %v36
  %v38 = vsel %vm37, %v20, 0.0
  %v39 = vsel %vm27, %v38, 0.0
  %40 = vadd.xlane.f32.xlu0 %v39
  %v41 = vpop.xlane.xlu0 %40
  %v42 = vld [vmem:[#allocation2] sm:$0xff]
  %v43 = vmax.f32 %v42, %v30
  %v44 = vld [vmem:[#allocation3] sm:$0xff]
  %v45 = vsub.f32 %v42, %v43
  %v46 = vmul.f32 %v45, 1.442695
  %v47 = vpow.pop %v46
  %v48 = vmul.f32 %v44, %v47
  %50 = vset.pattern.permute.xlu0 0
  %51 = vperm.xlu0 %50, %v43
  %v52 = vpop.permute.xlu0 %51
  %v54 = vsub.f32 %v20, %v52
  %v55 = vmul.f32 %v54, 1.442695
  %v56 = vpow.pop %v55
  %v57 = vsel %vm27, %v56, 0.0
  %58 = vadd.xlane.f32.xlu0 %v57
  %v59 = vpop.xlane.xlu0 %58
  %v60 = vadd.f32 %v48, %v59
  %vm61 = vcmask 7168
  %62 = vst.msk [vmem:[#allocation3] sm:$0xff] %vm61, %v60
  %63 = vst.msk [vmem:[#allocation2] sm:$0xff] %vm61, %v43
  %v64 = vld [vmem:[#allocation4] sm:$0xff]
  %v65 = vadd.f32 %v64, %v33
  %66 = vst.msk [vmem:[#allocation4] sm:$0xff] %vm61, %v65
  %v67 = vld [vmem:[#allocation5] sm:$0xff]
  %v68 = vadd.f32 %v67, %v41
  %69 = vst.msk [vmem:[#allocation5] sm:$0xff] %vm61, %v68
  // Predicated region
  $region14: #{tpu_custom_call.1} parent=0 // pred_check
    %p70 = pneg %p11
  $region15: #{tpu_custom_call.1} parent=0 // pred_check_branch
    %72 = sbr.rel (%p70) target = $region17
  $region16: #{tpu_custom_call.1} parent=0 // pred_region
    %v73 = vld [vmem:[#allocation2] sm:$0xff]
    %v74 = vld [vmem:[#allocation3] sm:$0xff]
    %v75 = vlog2.pop %v74
    %v76 = vmul.f32 %v75, 0.6931472
    %v77 = vadd.f32 %v73, %v76
    %v78 = vld [vmem:[#allocation5] sm:$0xff]
    %v79 = vmul.f32 %v78, 0.9
    %v80 = vsub.f32 %v77, %v79
    %v81 = vld [vmem:[#allocation4] sm:$0xff]
    %v82 = vmul.f32 %v81, 0.00625
    %v83 = vsub.f32 %v80, %v82
    %84 = vst.msk [vmem:[%s2] sm:$0xff] %vm61, %v83
  $region17: #{tpu_custom_call.1} parent=0 // pred_fallthru
    _
  // Predicated region
  $region18: #{tpu_custom_call.1} parent=0 // pred_check
    _
  $region19: #{tpu_custom_call.1} parent=0 // pred_check_branch
    %86 = sbr.rel (0) target = $region21
  $region20: #{tpu_custom_call.1} parent=0 // pred_region
    _
  $region21: #{tpu_custom_call.1} parent=0 // pred_fallthru
    _
  // Predicated region
  $region22: #{tpu_custom_call.1} parent=0 // pred_check
    _
  $region23: #{tpu_custom_call.1} parent=0 // pred_check_branch
    %88 = sbr.rel (0) target = $region25
  $region24: #{tpu_custom_call.1} parent=0 // pred_region
    _
  $region25: #{tpu_custom_call.1} parent=0 // pred_fallthru
    _

</llo_original>
